<compile_context>
chip_gen: v7x
topology: tpu7x:2x2x1
jax: 0.10.0
libtpu: 0.0.40
codegen_flags: <defaults>
</compile_context>

<pallas_src>
import functools

import jax
import jax.numpy as jnp
from jax import lax
from jax.experimental import pallas as pl
from jax.experimental.pallas import tpu as pltpu


def _round_up(x: int, m: int) -> int:
    return ((x + m - 1) // m) * m


def _choopy_loss_kernel(tril_ref, pos_ref, out_ref, lab_ref, partial_ref, *,
                        metric: str, approx_recip: bool):
    """One batch tile: build r for every cut position and emit sum(out * r)."""
    out = out_ref[...]                                   # (TB, L) f32 scores

    if metric == "f1":
        # bf16 labels / {0,1} tril are exact; f32 MXU accumulation -> exact
        # prefix counts of relevant docs per cut position.
        cum = jnp.dot(lab_ref[...], tril_ref[...],
                      preferred_element_type=jnp.float32)        # (TB, L)
        inv_k = pos_ref[...]                                     # (1, L) = 1/k
        total = cum[:, -1:]                                      # (TB, 1) #rel total
        inv_total = jnp.where(total > 0.0,
                              1.0 / jnp.where(total > 0.0, total, 1.0), 0.0)
        prec = cum * inv_k                                       # cum / k
        rec = cum * inv_total                                    # cum / total (0 if none)
        denom = prec + rec
        denom_safe = jnp.where(denom > 0.0, denom, 1.0)
        if approx_recip:
            inv_denom = pl.reciprocal(denom_safe, approx=True)   # EUP slot, ~1e-3 rel
        else:
            inv_denom = 1.0 / denom_safe
        r = jnp.where(denom > 0.0, (2.0 * prec) * rec * inv_denom, 0.0)
    else:  # 'dcg'
        disc = pos_ref[...]                                      # (1, L) = 1/log2(k+1)
        lab = lab_ref[...].astype(jnp.float32)                   # upcast right after load
        gains = (jnp.exp2(lab) - 1.0) * disc
        # keep the DCG prefix-sum matmul in f32 (gains are not bf16-exact)
        r = jnp.dot(gains, tril_ref[...], preferred_element_type=jnp.float32)

    # Fuse the reduction immediately so only a couple of (TB, L) temps are live.
    partial_ref[0, 0] = jnp.sum(out * r)


def choopy_loss(output, labels, metric: str = "f1", *, tb: int = 512,
                approx_recip: bool = False):
    """output: (B, L, 1) scores; labels: (B, L) integer-valued relevance grades."""
    B, L, _ = output.shape
    L_pad = _round_up(max(L, 128), 128)                 # lane-aligned list length
    TB = _round_up(min(tb, _round_up(B, 8)), 8)         # sublane-aligned batch tile
    B_pad = _round_up(B, TB)
    num_tiles = B_pad // TB

    out2d = output.reshape(B, L).astype(jnp.float32)
    lab2d = labels.astype(jnp.bfloat16)                 # integer grades -> exact in bf16
    # zero-pad BOTH scores and labels: padded rows/cols contribute exactly 0
    out_p = jnp.zeros((B_pad, L_pad), jnp.float32).at[:B, :L].set(out2d)
    lab_p = jnp.zeros((B_pad, L_pad), jnp.bfloat16).at[:B, :L].set(lab2d)

    # Hoisted position-dependent constants (computed once, resident in VMEM).
    k = jnp.arange(1, L_pad + 1, dtype=jnp.float32)
    if metric == "f1":
        pos_row = (1.0 / k)[None, :]
        tril_dtype = jnp.bfloat16                       # {0,1} -> exact
    else:
        pos_row = (1.0 / jnp.log2(k + 1.0))[None, :]
        tril_dtype = jnp.float32                        # keep dcg matmul in f32
    row = lax.broadcasted_iota(jnp.int32, (L_pad, L_pad), 0)
    col = lax.broadcasted_iota(jnp.int32, (L_pad, L_pad), 1)
    tril = (row <= col).astype(tril_dtype)              # (x @ tril) = prefix sums

    kernel = functools.partial(_choopy_loss_kernel, metric=metric,
                               approx_recip=approx_recip)
    partials = pl.pallas_call(
        kernel,
        out_shape=jax.ShapeDtypeStruct((num_tiles, 1), jnp.float32),
        grid_spec=pltpu.PrefetchScalarGridSpec(
            num_scalar_prefetch=0,
            grid=(num_tiles,),
            in_specs=[
                pl.BlockSpec((L_pad, L_pad), lambda i: (0, 0)),   # tril (resident)
                pl.BlockSpec((1, L_pad), lambda i: (0, 0)),       # 1/k or 1/log2(k+1)
                pl.BlockSpec((TB, L_pad), lambda i: (i, 0)),      # score tile
                pl.BlockSpec((TB, L_pad), lambda i: (i, 0)),      # label tile
            ],
            out_specs=pl.BlockSpec((1, 1), lambda i: (i, 0),
                                   memory_space=pltpu.MemorySpace.SMEM),
        ),
        compiler_params=pltpu.CompilerParams(
            dimension_semantics=("parallel",)),
    )(tril, pos_row, out_p, lab_p)

    # Independent per-tile partials -> combine and apply the -1/B scale here.
    return -jnp.sum(partials) / B


def choopy_loss_ref(output, labels, metric: str = "f1"):
    """Pure-JAX reference (mirrors the PyTorch double-loop semantics)."""
    B, L, _ = output.shape
    out2d = output.reshape(B, L).astype(jnp.float32)
    lab = labels.astype(jnp.float32)
    cum = jnp.cumsum(lab, axis=-1)
    k = jnp.arange(1, L + 1, dtype=jnp.float32)[None, :]
    if metric == "f1":
        total = jnp.sum(lab, axis=-1, keepdims=True)
        p = cum / k
        rr = jnp.where(total > 0, cum / jnp.where(total > 0, total, 1.0), 0.0)
        d = p + rr
        r = jnp.where(d > 0, 2.0 * p * rr / jnp.where(d > 0, d, 1.0), 0.0)
    else:
        gains = (2.0 ** lab - 1.0) / jnp.log2(k + 1.0)
        r = jnp.cumsum(gains, axis=-1)
    return -jnp.sum(out2d * r) / B


if __name__ == "__main__":
    key = jax.random.PRNGKey(0)
    k1, k2, k3, k4 = jax.random.split(key, 4)
    ok = True

    # Shapes implied by the module: a small batch of ranked lists.
    B, L = 2, 8
    output = jax.random.normal(k1, (B, L, 1), dtype=jnp.float32)
    labels = jax.random.bernoulli(k2, 0.4, (B, L)).astype(jnp.float32)
    for metric in ("f1", "dcg"):
        got = jax.block_until_ready(choopy_loss(output, labels, metric=metric))
        want = jax.block_until_ready(choopy_loss_ref(output, labels, metric=metric))
        if not jnp.allclose(got, want, rtol=1e-4, atol=1e-5):
            ok = False
            print(f"MISMATCH metric={metric}: kernel={got} ref={want}")

    # Unaligned batch + graded labels: exercises the zero-padding paths.
    B2, L2 = 5, 20
    output2 = jax.random.normal(k3, (B2, L2, 1), dtype=jnp.float32)
    labels2 = jax.random.randint(k4, (B2, L2), 0, 3).astype(jnp.float32)
    for metric in ("f1", "dcg"):
        got = jax.block_until_ready(choopy_loss(output2, labels2, metric=metric))
        want = jax.block_until_ready(choopy_loss_ref(output2, labels2, metric=metric))
        if not jnp.allclose(got, want, rtol=1e-4, atol=1e-5):
            ok = False
            print(f"MISMATCH (graded) metric={metric}: kernel={got} ref={want}")

    if ok:
        print("KERNEL_OK")
</pallas_src>

<mosaic_0001>
module attributes {stable_mosaic.version = 11 : i64} {
  func.func @_choopy_loss_kernel(%arg0: i32, %arg1: memref<128x128xbf16, #tpu.memory_space<vmem>>, %arg2: memref<1x128xf32, #tpu.memory_space<vmem>>, %arg3: memref<8x128xf32, #tpu.memory_space<vmem>>, %arg4: memref<8x128xbf16, #tpu.memory_space<vmem>>, %arg5: memref<1x1xf32, #tpu.memory_space<smem>>) attributes {dimension_semantics = [#tpu.dimension_semantics<parallel>], iteration_bounds = array<i64: 1>, scalar_prefetch = 0 : i64, scratch_operands = 0 : i64, tpu.core_type = #tpu.core_type<tc>, window_params = [{pipeline_mode = #tpu.pipeline_mode<synchronous>, transform_indices = @transform_0, window_bounds = array<i64: 128, 128>}, {pipeline_mode = #tpu.pipeline_mode<synchronous>, transform_indices = @transform_1, window_bounds = array<i64: 1, 128>}, {transform_indices = @transform_2, window_bounds = array<i64: 8, 128>}, {transform_indices = @transform_3, window_bounds = array<i64: 8, 128>}, {transform_indices = @transform_4, window_bounds = array<i64: 1, 1>}]} {
    %c0 = arith.constant 0 : index
    %c0_0 = arith.constant 0 : index
    %0 = vector.load %arg3[%c0, %c0_0] : memref<8x128xf32, #tpu.memory_space<vmem>>, vector<8x128xf32>
    %c0_1 = arith.constant 0 : index
    %c0_2 = arith.constant 0 : index
    %1 = vector.load %arg4[%c0_1, %c0_2] : memref<8x128xbf16, #tpu.memory_space<vmem>>, vector<8x128xbf16>
    %c0_3 = arith.constant 0 : index
    %c0_4 = arith.constant 0 : index
    %2 = vector.load %arg1[%c0_3, %c0_4] : memref<128x128xbf16, #tpu.memory_space<vmem>>, vector<128x128xbf16>
    %cst = arith.constant dense<0.000000e+00> : vector<8x128xf32>
    %3 = tpu.matmul %1, %2, %cst {dimension_numbers = #tpu.dot_dimension_numbers<[1], [0], [0], [1], [0, 0, 1, 1], [], []>} : vector<8x128xbf16>, vector<128x128xbf16>, vector<8x128xf32> -> vector<8x128xf32>
    %c0_5 = arith.constant 0 : index
    %c0_6 = arith.constant 0 : index
    %4 = vector.load %arg2[%c0_5, %c0_6] : memref<1x128xf32, #tpu.memory_space<vmem>>, vector<1x128xf32>
    %5 = vector.extract_strided_slice %3 {offsets = [0, 127], sizes = [8, 1], strides = [1, 1]} : vector<8x128xf32> to vector<8x1xf32>
    %cst_7 = arith.constant 0.000000e+00 : f32
    %6 = vector.broadcast %cst_7 : f32 to vector<8x1xf32>
    %7 = arith.cmpf ogt, %5, %6 : vector<8x1xf32>
    %cst_8 = arith.constant 0.000000e+00 : f32
    %8 = vector.broadcast %cst_8 : f32 to vector<8x1xf32>
    %9 = arith.cmpf ogt, %5, %8 : vector<8x1xf32>
    %cst_9 = arith.constant 1.000000e+00 : f32
    %10 = vector.broadcast %cst_9 : f32 to vector<8x1xf32>
    %11 = arith.select %9, %5, %10 : vector<8x1xi1>, vector<8x1xf32>
    %cst_10 = arith.constant 1.000000e+00 : f32
    %12 = vector.broadcast %cst_10 : f32 to vector<8x1xf32>
    %13 = arith.divf %12, %11 : vector<8x1xf32>
    %cst_11 = arith.constant 0.000000e+00 : f32
    %14 = vector.broadcast %cst_11 : f32 to vector<8x1xf32>
    %15 = arith.select %7, %13, %14 : vector<8x1xi1>, vector<8x1xf32>
    %16 = vector.broadcast %4 : vector<1x128xf32> to vector<8x128xf32>
    %17 = arith.mulf %3, %16 : vector<8x128xf32>
    %18 = vector.broadcast %15 : vector<8x1xf32> to vector<8x128xf32>
    %19 = arith.mulf %3, %18 : vector<8x128xf32>
    %20 = arith.addf %17, %19 : vector<8x128xf32>
    %cst_12 = arith.constant 0.000000e+00 : f32
    %21 = vector.broadcast %cst_12 : f32 to vector<8x128xf32>
    %22 = arith.cmpf ogt, %20, %21 : vector<8x128xf32>
    %cst_13 = arith.constant 1.000000e+00 : f32
    %23 = vector.broadcast %cst_13 : f32 to vector<8x128xf32>
    %24 = arith.select %22, %20, %23 : vector<8x128xi1>, vector<8x128xf32>
    %cst_14 = arith.constant 1.000000e+00 : f32
    %25 = vector.broadcast %cst_14 : f32 to vector<8x128xf32>
    %26 = arith.divf %25, %24 : vector<8x128xf32>
    %cst_15 = arith.constant 0.000000e+00 : f32
    %27 = vector.broadcast %cst_15 : f32 to vector<8x128xf32>
    %28 = arith.cmpf ogt, %20, %27 : vector<8x128xf32>
    %cst_16 = arith.constant 2.000000e+00 : f32
    %29 = vector.broadcast %cst_16 : f32 to vector<8x128xf32>
    %30 = arith.mulf %29, %17 : vector<8x128xf32>
    %31 = arith.mulf %30, %19 : vector<8x128xf32>
    %32 = arith.mulf %31, %26 : vector<8x128xf32>
    %cst_17 = arith.constant 0.000000e+00 : f32
    %33 = vector.broadcast %cst_17 : f32 to vector<8x128xf32>
    %34 = arith.select %28, %32, %33 : vector<8x128xi1>, vector<8x128xf32>
    %35 = arith.mulf %0, %34 : vector<8x128xf32>
    %36 = vector.shape_cast %35 : vector<8x128xf32> to vector<1x8x128xf32>
    %cst_18 = arith.constant dense<0.000000e+00> : vector<1xf32>
    %37 = vector.multi_reduction <add>, %36, %cst_18 [1, 2] : vector<1x8x128xf32> to vector<1xf32>
    %38 = vector.shape_cast %37 : vector<1xf32> to vector<1x1x1xf32>
    %39 = vector.extract %38[0, 0, 0] : f32 from vector<1x1x1xf32>
    %c0_19 = arith.constant 0 : index
    %c0_20 = arith.constant 0 : index
    %40 = memref.load %arg5[%c0_19, %c0_20] : memref<1x1xf32, #tpu.memory_space<smem>>
    memref.store %39, %arg5[%c0_19, %c0_20] : memref<1x1xf32, #tpu.memory_space<smem>>
    return
  }
  func.func @transform_0(%arg0: i32) -> (i32, i32) {
    %c0_i32 = arith.constant 0 : i32
    %c0_i32_0 = arith.constant 0 : i32
    %c0_i32_1 = arith.constant 0 : i32
    return %c0_i32, %c0_i32_0 : i32, i32
  }
  func.func @transform_1(%arg0: i32) -> (i32, i32) {
    %c0_i32 = arith.constant 0 : i32
    %c0_i32_0 = arith.constant 0 : i32
    %c0_i32_1 = arith.constant 0 : i32
    return %c0_i32, %c0_i32_0 : i32, i32
  }
  func.func @transform_2(%arg0: i32) -> (i32, i32) {
    %c0_i32 = arith.constant 0 : i32
    %c0_i32_0 = arith.constant 0 : i32
    return %arg0, %c0_i32 : i32, i32
  }
  func.func @transform_3(%arg0: i32) -> (i32, i32) {
    %c0_i32 = arith.constant 0 : i32
    %c0_i32_0 = arith.constant 0 : i32
    return %arg0, %c0_i32 : i32, i32
  }
  func.func @transform_4(%arg0: i32) -> (i32, i32) {
    %c0_i32 = arith.constant 0 : i32
    %c0_i32_0 = arith.constant 0 : i32
    return %arg0, %c0_i32 : i32, i32
  }
}

</mosaic_0001>

<llo_original>
// kernel: tpu_custom_call.1
$region0: #{tpu_custom_call.1}
  #allocation0 [shape = 'u32[]', space=smem, size = 0x4, offset = 0x4, fixed_abs, tag = 'smem constant byte address 0x4 - core index']
  #allocation1 [shape = 'u32[144,128]{1,0:T(1,128)}', space=vmem, size = 0x12000, scoped, tag = 'internal scratch']
  %s0 = inlined_call_operand.hbm [shape: bf16[128,128], index: 0, kind: input, shape index: {}]
  %s1 = inlined_call_operand.vmem [shape: f32[1,128], index: 1, kind: input, shape index: {}]
  %s2 = inlined_call_operand.hbm [shape: f32[8,128], index: 2, kind: input, shape index: {}]
  %s3 = inlined_call_operand.vmem [shape: bf16[8,128], index: 3, kind: input, shape index: {}]
  %s4 = inlined_call_operand.hbm [shape: f32[1,1], index: 4, kind: output, shape index: {}]
  %s5 = sld [smem:[#allocation0]]
  $region34: #{tpu_custom_call.1} parent=0
    _
  %s7 = ssub.s32 1, %s5
  %s8 = scalar_select 0, %s7, %s5
  $region1: #{tpu_custom_call.1} parent=0
    #allocation2 [shape = 'u8[32768]{0}', space=vmem, size = 0x8000, scoped, tag = 'input window, operand 0, single buffered']
    #allocation3 [shape = 's32[1]{0}', space=sflag, size = 0x4, scoped, tag = 'scoped memory for tpu_custom_call.1']
    #allocation4 [shape = 's32[1]{0}', space=sflag, size = 0x4, scoped, tag = 'scoped memory for tpu_custom_call.1']
    #allocation5 [shape = 'u8[4096]{0}', space=vmem, size = 0x1000, scoped, tag = 'input window, operand 2, single buffered']
    #allocation6 [shape = 's32[1]{0}', space=sflag, size = 0x4, scoped, tag = 'scoped memory for tpu_custom_call.1']
    #allocation7 [shape = 'u8[512]{0}', space=smem, size = 0x200, scoped, tag = 'output window, operand 0, single buffered']
    %9 = vsyncpa [#allocation3], 0
    %10 = vsyncpa [#allocation6], 0
    %11 = vsyncpa [#allocation4], 0
    // Predicated region
    $region2: #{tpu_custom_call.1} parent=1 // pred_check
      _
    $region3: #{tpu_custom_call.1} parent=1 // pred_check_branch
      %13 = sbr.rel (0) target = $region5
    $region4: #{tpu_custom_call.1} parent=1 // pred_region
      %s15 = ssub.s32 1024, 1024
      %16 = vsyncadd [#allocation3], %s15
      %s17 = sshll.u32 [#allocation2], 4
      %s18 = int_to_ptr.vmem [resolvable:$true] %s17
      %23 = dma.hbm_to_vmem [thread:$0]  %s0, 1024, %s18, [#allocation3], 64, 64, 4
    $region5: #{tpu_custom_call.1} parent=1 // pred_fallthru
      _
    // Predicated region
    $region6: #{tpu_custom_call.1} parent=1 // pred_check
      _
    $region7: #{tpu_custom_call.1} parent=1 // pred_check_branch
      %25 = sbr.rel (0) target = $region9
    $region8: #{tpu_custom_call.1} parent=1 // pred_region
      _
    $region9: #{tpu_custom_call.1} parent=1 // pred_fallthru
      _
    // Predicated region
    $region10: #{tpu_custom_call.1} parent=1 // pred_check
      _
    $region11: #{tpu_custom_call.1} parent=1 // pred_check_branch
      %27 = sbr.rel (0) target = $region13
    $region12: #{tpu_custom_call.1} parent=1 // pred_region
      %s29 = ssub.s32 128, 128
      %30 = vsyncadd [#allocation6], %s29
      %s32 = sshll.u32 [#allocation5], 4
      %s33 = int_to_ptr.vmem [resolvable:$true] %s32
      %35 = dma.hbm_to_vmem [thread:$0]  %s2, 128, %s33, [#allocation6]
    $region13: #{tpu_custom_call.1} parent=1 // pred_fallthru
      _
    // Predicated region
    $region14: #{tpu_custom_call.1} parent=1 // pred_check
      _
    $region15: #{tpu_custom_call.1} parent=1 // pred_check_branch
      %37 = sbr.rel (0) target = $region17
    $region16: #{tpu_custom_call.1} parent=1 // pred_region
      _
    $region17: #{tpu_custom_call.1} parent=1 // pred_fallthru
      _
    // Predicated region
    $region18: #{tpu_custom_call.1} parent=1 // pred_check
      _
    $region19: #{tpu_custom_call.1} parent=1 // pred_check_branch
      %39 = sbr.rel (0) target = $region21
    $region20: #{tpu_custom_call.1} parent=1 // pred_region
      %40 = dma.done [#allocation3], 1024
    $region21: #{tpu_custom_call.1} parent=1 // pred_fallthru
      _
    // Predicated region
    $region22: #{tpu_custom_call.1} parent=1 // pred_check
      _
    $region23: #{tpu_custom_call.1} parent=1 // pred_check_branch
      %42 = sbr.rel (0) target = $region25
    $region24: #{tpu_custom_call.1} parent=1 // pred_region
      %43 = dma.done [#allocation6], 128
    $region25: #{tpu_custom_call.1} parent=1 // pred_fallthru
      _
    %v45 = vld [vmem:[#allocation5] sm:$0xff]
    %v46 = vld [vmem:[%s3] sm:$0xf]
    %v47 = vld [vmem:[#allocation2] sm:$0xf]
    %v48 = vld [vmem:[#allocation2 + $0x4] sm:$0xf]
    %v49 = vld [vmem:[#allocation2 + $0x8] sm:$0xf]
    %v50 = vld [vmem:[#allocation2 + $0xc] sm:$0xf]
    %v51 = vld [vmem:[#allocation2 + $0x10] sm:$0xf]
    %v52 = vld [vmem:[#allocation2 + $0x14] sm:$0xf]
    %v53 = vld [vmem:[#allocation2 + $0x18] sm:$0xf]
    %v54 = vld [vmem:[#allocation2 + $0x1c] sm:$0xf]
    %v55 = vld [vmem:[#allocation2 + $0x20] sm:$0xf]
    %v56 = vld [vmem:[#allocation2 + $0x24] sm:$0xf]
    %v57 = vld [vmem:[#allocation2 + $0x28] sm:$0xf]
    %v58 = vld [vmem:[#allocation2 + $0x2c] sm:$0xf]
    %v59 = vld [vmem:[#allocation2 + $0x30] sm:$0xf]
    %v60 = vld [vmem:[#allocation2 + $0x34] sm:$0xf]
    %v61 = vld [vmem:[#allocation2 + $0x38] sm:$0xf]
    %v62 = vld [vmem:[#allocation2 + $0x3c] sm:$0xf]
    %v79 = vunpack.c.l.b16 %v47
    %v80 = vunpack.c.l.b16 %v48
    %v81 = vunpack.c.l.b16 %v49
    %v82 = vunpack.c.l.b16 %v50
    %v83 = vunpack.c.l.b16 %v51
    %v84 = vunpack.c.l.b16 %v52
    %v85 = vunpack.c.l.b16 %v53
    %v86 = vunpack.c.l.b16 %v54
    %v87 = vunpack.c.l.b16 %v55
    %v88 = vunpack.c.l.b16 %v56
    %v89 = vunpack.c.l.b16 %v57
    %v90 = vunpack.c.l.b16 %v58
    %v91 = vunpack.c.l.b16 %v59
    %v92 = vunpack.c.l.b16 %v60
    %v93 = vunpack.c.l.b16 %v61
    %v94 = vunpack.c.l.b16 %v62
    %v95 = vpack.c.b16 %v80, %v79
    %v96 = vpack.c.b16 %v82, %v81
    %v97 = vpack.c.b16 %v84, %v83
    %v98 = vpack.c.b16 %v86, %v85
    %v99 = vpack.c.b16 %v88, %v87
    %v100 = vpack.c.b16 %v90, %v89
    %v101 = vpack.c.b16 %v92, %v91
    %v102 = vpack.c.b16 %v94, %v93
    %111 = vmatprep.subr.bf16.mxu0 0
    %112 = vmatpush1.bf16.msra.mxu0 %v95
    %113 = vmatprep.subr.bf16.mxu0 0
    %114 = vmatpush1.bf16.msra.mxu0 %v96
    %115 = vmatprep.subr.bf16.mxu0 0
    %116 = vmatpush1.bf16.msra.mxu0 %v97
    %117 = vmatprep.subr.bf16.mxu0 0
    %118 = vmatpush1.bf16.msra.mxu0 %v98
    %119 = vmatprep.subr.bf16.mxu0 0
    %120 = vmatpush1.bf16.msra.mxu0 %v99
    %121 = vmatprep.subr.bf16.mxu0 0
    %122 = vmatpush1.bf16.msra.mxu0 %v100
    %123 = vmatprep.subr.bf16.mxu0 0
    %124 = vmatpush1.bf16.msra.mxu0 %v101
    %125 = vmatprep.subr.bf16.mxu0 0
    %126 = vmatpush1.bf16.msra.mxu0 %v102
    %127 = vmatprep.subr.bf16.mxu0 0
    %128 = vmatpush1.bf16.msra.mxu0 0
    %129 = vmatprep.subr.bf16.mxu0 0
    %130 = vmatpush1.bf16.msra.mxu0 0
    %131 = vmatprep.subr.bf16.mxu0 0
    %132 = vmatpush1.bf16.msra.mxu0 0
    %133 = vmatprep.subr.bf16.mxu0 0
    %134 = vmatpush1.bf16.msra.mxu0 0
    %135 = vmatprep.subr.bf16.mxu0 0
    %136 = vmatpush1.bf16.msra.mxu0 0
    %137 = vmatprep.subr.bf16.mxu0 0
    %138 = vmatpush1.bf16.msra.mxu0 0
    %139 = vmatprep.subr.bf16.mxu0 0
    %140 = vmatpush1.bf16.msra.mxu0 0
    %141 = vmatprep.subr.bf16.mxu0 0
    %142 = vmatpush1.bf16.msra.mxu0 0
    %143 = vmatprep.mubr.bf16.mxu0 0
    %144 = vmatmul.mubr.bf16.gmra.mrb[0].mxu0 %v46
    %v145 = vpop.f32.mrb[0].mxu0
    %v146 = vadd.f32 0.0, %v145
    %v147 = vpop.f32.mrb[0].mxu0
    %v148 = vpop.f32.mrb[0].mxu0
    %v149 = vpop.f32.mrb[0].mxu0
    %150 = vdwg.mxu0
    %v151 = vld [vmem:[%s1] sm:$0x1]
    %vm152 = vcmp.gt.f32.partialorder %v146, 0.0
    %v153 = vsel %vm152, %v146, 1.0
    %v154 = vrcp.pop %v153
    %v155 = vmul.f32 1.0, %v154
    %v156 = vsel %vm152, %v155, 0.0
    %v158 = vlaneseq
    %v159 = vshrl.u32 %v158, 7
    %v160 = vsub.s32 0, %v159
    %v161 = vrot.slane %v151, %v160
    %v163 = vmul.f32 %v146, %v161
    %165 = vset.pattern.permute.xlu0 127
    %166 = vperm.xlu0 %165, %v156
    %v167 = vpop.permute.xlu0 %166
    %v169 = vmul.f32 %v146, %v167
    %v170 = vadd.f32 %v163, %v169
    %vm171 = vcmp.gt.f32.partialorder %v170, 0.0
    %v172 = vsel %vm171, %v170, 1.0
    %v173 = vrcp.pop %v172
    %v174 = vmul.f32 1.0, %v173
    %v175 = vmul.f32 %v163, 2.0
    %v176 = vmul.f32 %v175, %v169
    %v177 = vmul.f32 %v176, %v174
    %v178 = vsel %vm171, %v177, 0.0
    %v179 = vmul.f32 %v45, %v178
    %180 = vadd.xlane.f32.xlu0 %v179
    %v181 = vpop.xlane.xlu0 %180
    %v182 = vrot.slane %v181, 4
    %v183 = vadd.f32 %v181, %v182
    %v184 = vrot.slane %v183, 2
    %v185 = vadd.f32 %v183, %v184
    %v186 = vrot.slane %v185, 1
    %v187 = vadd.f32 %v185, %v186
    %s188 = vtos %v187
    %s189 = scalar_lea.smem [#allocation7], 0
    %190 = sst [smem:[%s189]] %s188
    // Predicated region
    $region26: #{tpu_custom_call.1} parent=1 // pred_check
      _
    $region27: #{tpu_custom_call.1} parent=1 // pred_check_branch
      %192 = sbr.rel (0) target = $region29
    $region28: #{tpu_custom_call.1} parent=1 // pred_region
      %s194 = ssub.s32 16, 16
      %195 = vsyncadd [#allocation4], %s194
      %198 = dma.smem_to_hbm [#allocation7], 16, %s4, [#allocation4]
    $region29: #{tpu_custom_call.1} parent=1 // pred_fallthru
      _
    // Predicated region
    $region30: #{tpu_custom_call.1} parent=1 // pred_check
      _
    $region31: #{tpu_custom_call.1} parent=1 // pred_check_branch
      %200 = sbr.rel (0) target = $region33
    $region32: #{tpu_custom_call.1} parent=1 // pred_region
      %201 = dma.done [#allocation4], 16
    $region33: #{tpu_custom_call.1} parent=1 // pred_fallthru
      _
    %202 = sfence
    %203 = vsyncpa [#allocation3], 1
    %204 = vsyncpa [#allocation6], 1
    %205 = vsyncpa [#allocation4], 1

</llo_original>
